<compile_context>
chip_gen: v7x
topology: tpu7x:2x2x1
jax: 0.10.0
libtpu: 0.0.40
codegen_flags: <defaults>
</compile_context>

<pallas_src>
import math

import jax
import jax.numpy as jnp
from jax.experimental import pallas as pl
from jax.experimental.pallas import tpu as pltpu

_MIB = 1024 * 1024


def _layer_scale_kernel(x_ref, gamma_ref, o_ref):
    # x_ref: (tile_rows, lane_dim); gamma_ref: (1, lane_dim), VMEM-resident
    # across the grid.  Single VPU broadcast multiply per tile.
    o_ref[...] = x_ref[...] * gamma_ref[...]


def _sublane_multiple(dtype) -> int:
    # (8, 128) base tiling; sub-32-bit dtypes pack along sublanes:
    # f32 -> 8, bf16/f16 -> 16, int8/fp8 -> 32.
    itemsize = jnp.dtype(dtype).itemsize
    return max(8, 32 // itemsize)


def _round_up(x: int, m: int) -> int:
    return ((x + m - 1) // m) * m


def _vmem_capacity_bytes() -> int:
    try:
        return int(pltpu.get_tpu_info().vmem_capacity_bytes)
    except Exception:
        # Conservative fallback: v7x has 64 MiB VMEM per TensorCore.
        return 64 * _MIB


def _tpu_core_count() -> int:
    """Best-effort TensorCores-per-chip count (2 on v7x, 1 on v5e/v6e)."""
    try:
        info = pltpu.get_tpu_info()
        for attr in ("num_cores", "core_count", "num_tensorcores",
                     "tensorcores_per_chip"):
            v = getattr(info, attr, None)
            if v:
                return int(v)
        # Heuristic: 64 MiB VMEM per TC -> v7x -> 2 TCs per chip.
        if int(info.vmem_capacity_bytes) <= 64 * _MIB:
            return 2
    except Exception:
        pass
    try:
        kind = jax.devices()[0].device_kind.lower()
        if "v7" in kind:
            return 2
    except Exception:
        pass
    return 1


def _lane_fold_factor(rows: int, dim: int) -> int:
    """Smallest k with (k*dim) % 128 == 0 and rows % k == 0; 1 if none/no-op."""
    if dim <= 0 or rows <= 0 or dim % 128 == 0:
        return 1
    k = 128 // math.gcd(dim, 128)
    if k > 1 and rows % k == 0:
        return k
    return 1


def _max_feasible_tile(lane_dim: int, dtype) -> int:
    """Largest tile_rows whose double-buffered footprint (with headroom) fits VMEM."""
    itemsize = jnp.dtype(dtype).itemsize
    sub = _sublane_multiple(dtype)
    vmem_cap = _vmem_capacity_bytes()
    budget = (vmem_cap * 3) // 4 - 4 * _MIB
    # needed ~= 1.25 * 4 * block_bytes  ==>  5 * block_bytes <= budget.
    tile = budget // max(5 * lane_dim * itemsize, 1)
    return max(sub, (tile // sub) * sub)


def _vmem_limit_bytes(tile_rows: int, lane_dim: int, dtype) -> int:
    """VMEM limit derived from the *final* tile, with ~25% compiler headroom."""
    itemsize = jnp.dtype(dtype).itemsize
    vmem_cap = _vmem_capacity_bytes()
    block_bytes = tile_rows * lane_dim * itemsize
    # Double-buffered input + output blocks + (double-buffered) gamma row.
    needed = 4 * block_bytes + 2 * lane_dim * itemsize + 2 * _MIB
    limit = int(needed * 1.25)          # headroom for internal scratch / masking
    limit = max(limit, 32 * _MIB)
    limit = min(limit, (vmem_cap * 3) // 4)
    return int(limit)


def _pick_tile_rows(rows: int, lane_dim: int, dtype, num_cores: int) -> int:
    """Choose tile_rows from a VMEM budget, HW-aware (multi-TC splitting)."""
    itemsize = jnp.dtype(dtype).itemsize
    sub = _sublane_multiple(dtype)
    rows_aligned = _round_up(max(rows, 1), sub)

    vmem_cap = _vmem_capacity_bytes()
    budget = min(vmem_cap // 2, 48 * _MIB)
    target_block_bytes = max(budget // 6, 512 * 1024)

    bytes_per_row = max(lane_dim * itemsize, 1)
    tile = max(sub, (target_block_bytes // bytes_per_row) // sub * sub)
    tile = min(tile, rows_aligned)
    tile = min(tile, _max_feasible_tile(lane_dim, dtype))

    # Split into >= 2 blocks only when it can help:
    #  * multi-TC parts (v7x) shard the "parallel" row axis across cores, or
    #  * each resulting block is still >= ~1 MiB (DMA stays efficient).
    # On single-TC chips with tiny inputs, extra grid steps are pure ~0.35 us
    # per-step overhead for this HBM-bound op, so keep one big block.
    if rows_aligned >= 2 * sub:
        half = _round_up(pl.cdiv(rows_aligned, 2), sub)
        if num_cores >= 2 or half * bytes_per_row >= _MIB:
            tile = min(tile, half)

    # v7x: prefer an even block count when the grid is small, so both cores get
    # equal work (an odd count like 3 leaves one TC idle for ~1/3 of the op).
    if num_cores >= 2 and tile >= 2 * sub:
        nblk = pl.cdiv(rows_aligned, tile)
        if nblk <= 8 and nblk % 2 == 1:
            tile = max(sub, _round_up(pl.cdiv(rows_aligned, nblk + 1), sub))

    return int(tile)


def layer_scale(x: jax.Array, gamma: jax.Array, *, tile_rows: int | None = None) -> jax.Array:
    """Applies y = x * gamma with gamma (dim,) broadcast along the last axis."""
    orig_shape = x.shape
    dim = orig_shape[-1]
    assert gamma.shape == (dim,), f"gamma must have shape ({dim},), got {gamma.shape}"

    # Keep the whole multiply in x.dtype; output dtype matches x, like the
    # module.  (f32 gamma -> bf16 cast quantizes gamma by up to ~0.4% rel.,
    # matching a pure-bf16 PyTorch module.)
    if gamma.dtype != x.dtype:
        gamma = gamma.astype(x.dtype)

    rows = 1
    for s in orig_shape[:-1]:
        rows *= s

    # Degenerate / empty inputs: nothing for a kernel to do.
    if rows == 0 or dim == 0:
        return x

    # Lane-dense folding for non-128-multiple dims (64 / 96 / 192 / ...).
    k = _lane_fold_factor(rows, dim)
    lane_dim = k * dim
    rows_f = rows // k
    x2d = x.reshape(rows_f, lane_dim)
    gamma_row = jnp.tile(gamma, (k,)) if k > 1 else gamma
    gamma2d = gamma_row.reshape(1, lane_dim)

    num_cores = _tpu_core_count()
    sub = _sublane_multiple(x.dtype)
    if tile_rows is None:
        tile_rows = _pick_tile_rows(rows_f, lane_dim, x.dtype, num_cores)
    else:
        # Respect the override, but align it and clamp to what fits in VMEM.
        tile_rows = max(sub, _round_up(int(tile_rows), sub))
        tile_rows = min(tile_rows, _round_up(rows_f, sub))
        tile_rows = min(tile_rows, _max_feasible_tile(lane_dim, x.dtype))

    # VMEM limit derived from the final tile (auto or user-supplied).
    vmem_limit = _vmem_limit_bytes(tile_rows, lane_dim, x.dtype)

    # Ceiling-divide grid: no host-side padding or output slicing needed.
    grid = (pl.cdiv(rows_f, tile_rows),)

    out = pl.pallas_call(
        _layer_scale_kernel,
        out_shape=jax.ShapeDtypeStruct((rows_f, lane_dim), x.dtype),
        grid_spec=pltpu.PrefetchScalarGridSpec(
            num_scalar_prefetch=0,
            grid=grid,
            in_specs=[
                pl.BlockSpec((tile_rows, lane_dim), lambda i: (i, 0)),
                # Constant index_map -> gamma stays resident, DMA'd once.
                pl.BlockSpec((1, lane_dim), lambda i: (0, 0)),
            ],
            out_specs=pl.BlockSpec((tile_rows, lane_dim), lambda i: (i, 0)),
        ),
        compiler_params=pltpu.CompilerParams(
            dimension_semantics=("parallel",),
            vmem_limit_bytes=vmem_limit,
        ),
    )(x2d, gamma2d)

    return out.reshape(orig_shape)


if __name__ == "__main__":
    init_values = 1e-5
    key = jax.random.PRNGKey(0)
    k1, k2, k3, k4 = jax.random.split(key, 4)

    # Case 1: f32 transformer token tensor (B, N, dim) with lane-aligned dim.
    batch, seq, dim = 2, 8, 128
    x = jax.random.normal(k1, (batch, seq, dim), dtype=jnp.float32)
    gamma = init_values * jnp.ones((dim,), dtype=jnp.float32)
    y = jax.block_until_ready(layer_scale(x, gamma))
    assert y.shape == x.shape and y.dtype == x.dtype
    assert jnp.allclose(y, x * gamma, atol=1e-6, rtol=1e-6)

    # Case 2: bf16 activations + f32 gamma, ragged row count (3*5 = 15 rows)
    # exercising the partial last block and dtype-aware sublane tiling.
    xb = jax.random.normal(k2, (3, 5, dim), dtype=jnp.bfloat16)
    yb = jax.block_until_ready(layer_scale(xb, gamma))
    yb_ref = xb * gamma.astype(jnp.bfloat16)
    assert yb.shape == xb.shape and yb.dtype == jnp.bfloat16
    assert jnp.allclose(yb.astype(jnp.float32), yb_ref.astype(jnp.float32),
                        atol=1e-2, rtol=1e-2)

    # Case 3: dim = 64 (not a multiple of 128), rows divisible by the fold
    # factor k = 2 -> lane-dense folded path (lane width 128).
    dim3 = 64
    x3 = jax.random.normal(k3, (2, 8, dim3), dtype=jnp.float32)
    g3 = init_values * jnp.ones((dim3,), dtype=jnp.float32)
    y3 = jax.block_until_ready(layer_scale(x3, g3))
    assert y3.shape == x3.shape and y3.dtype == x3.dtype
    assert jnp.allclose(y3, x3 * g3, atol=1e-6, rtol=1e-6)

    # Case 4: dim = 96, rows = 10 not divisible by the fold factor (k = 4)
    # -> falls back to the unfolded (masked-store) path; correctness only.
    dim4 = 96
    x4 = jax.random.normal(k4, (2, 5, dim4), dtype=jnp.float32)
    g4 = init_values * jnp.ones((dim4,), dtype=jnp.float32)
    y4 = jax.block_until_ready(layer_scale(x4, g4))
    assert y4.shape == x4.shape and y4.dtype == x4.dtype
    assert jnp.allclose(y4, x4 * g4, atol=1e-6, rtol=1e-6)

    print("KERNEL_OK")
</pallas_src>

<mosaic_0001>
module attributes {stable_mosaic.version = 11 : i64} {
  func.func @_layer_scale_kernel(%arg0: i32, %arg1: memref<16x128xf32, #tpu.memory_space<vmem>>, %arg2: memref<1x128xf32, #tpu.memory_space<vmem>>, %arg3: memref<16x128xf32, #tpu.memory_space<vmem>>) attributes {dimension_semantics = [#tpu.dimension_semantics<parallel>], iteration_bounds = array<i64: 1>, scalar_prefetch = 0 : i64, scratch_operands = 0 : i64, tpu.core_type = #tpu.core_type<tc>, window_params = [{transform_indices = @transform_0, window_bounds = array<i64: 16, 128>}, {pipeline_mode = #tpu.pipeline_mode<synchronous>, transform_indices = @transform_1, window_bounds = array<i64: 1, 128>}, {transform_indices = @transform_2, window_bounds = array<i64: 16, 128>}]} {
    %c0 = arith.constant 0 : index
    %c0_0 = arith.constant 0 : index
    %0 = vector.load %arg1[%c0, %c0_0] : memref<16x128xf32, #tpu.memory_space<vmem>>, vector<16x128xf32>
    %c0_1 = arith.constant 0 : index
    %c0_2 = arith.constant 0 : index
    %1 = vector.load %arg2[%c0_1, %c0_2] : memref<1x128xf32, #tpu.memory_space<vmem>>, vector<1x128xf32>
    %2 = vector.broadcast %1 : vector<1x128xf32> to vector<16x128xf32>
    %3 = arith.mulf %0, %2 : vector<16x128xf32>
    %c0_3 = arith.constant 0 : index
    %c0_4 = arith.constant 0 : index
    %4 = vector.load %arg3[%c0_3, %c0_4] : memref<16x128xf32, #tpu.memory_space<vmem>>, vector<16x128xf32>
    tpu.vector_store %arg3[%c0_3, %c0_4], %3 {strides = array<i32>} : memref<16x128xf32, #tpu.memory_space<vmem>>, vector<16x128xf32>,
    return
  }
  func.func @transform_0(%arg0: i32) -> (i32, i32) {
    %c0_i32 = arith.constant 0 : i32
    %c0_i32_0 = arith.constant 0 : i32
    return %arg0, %c0_i32 : i32, i32
  }
  func.func @transform_1(%arg0: i32) -> (i32, i32) {
    %c0_i32 = arith.constant 0 : i32
    %c0_i32_0 = arith.constant 0 : i32
    %c0_i32_1 = arith.constant 0 : i32
    return %c0_i32, %c0_i32_0 : i32, i32
  }
  func.func @transform_2(%arg0: i32) -> (i32, i32) {
    %c0_i32 = arith.constant 0 : i32
    %c0_i32_0 = arith.constant 0 : i32
    return %arg0, %c0_i32 : i32, i32
  }
}

</mosaic_0001>

<llo_original>
// kernel: tpu_custom_call.1
$region0: #{tpu_custom_call.1}
  #allocation0 [shape = 'u32[]', space=smem, size = 0x4, offset = 0x4, fixed_abs, tag = 'smem constant byte address 0x4 - core index']
  #allocation1 [shape = 'u32[144,128]{1,0:T(1,128)}', space=vmem, size = 0x12000, scoped, tag = 'internal scratch']
  %s0 = inlined_call_operand.hbm [shape: f32[16,128], index: 0, kind: input, shape index: {}]
  %s1 = inlined_call_operand.vmem [shape: f32[1,128], index: 1, kind: input, shape index: {}]
  %s2 = inlined_call_operand.hbm [shape: f32[16,128], index: 2, kind: output, shape index: {}]
  %s3 = sld [smem:[#allocation0]]
  $region22: #{tpu_custom_call.1} parent=0
    _
  %s5 = ssub.s32 1, %s3
  %s6 = scalar_select 0, %s5, %s3
  $region1: #{tpu_custom_call.1} parent=0
    #allocation2 [shape = 'u8[8192]{0}', space=vmem, size = 0x2000, scoped, tag = 'input window, operand 0, single buffered']
    #allocation3 [shape = 's32[1]{0}', space=sflag, size = 0x4, scoped, tag = 'scoped memory for tpu_custom_call.1']
    #allocation4 [shape = 's32[1]{0}', space=sflag, size = 0x4, scoped, tag = 'scoped memory for tpu_custom_call.1']
    #allocation5 [shape = 'u8[8192]{0}', space=vmem, size = 0x2000, scoped, tag = 'output window, operand 0, single buffered']
    %7 = vsyncpa [#allocation3], 0
    %8 = vsyncpa [#allocation4], 0
    // Predicated region
    $region2: #{tpu_custom_call.1} parent=1 // pred_check
      _
    $region3: #{tpu_custom_call.1} parent=1 // pred_check_branch
      %10 = sbr.rel (0) target = $region5
    $region4: #{tpu_custom_call.1} parent=1 // pred_region
      %s12 = ssub.s32 256, 256
      %13 = vsyncadd [#allocation3], %s12
      %s14 = sshll.u32 [#allocation2], 4
      %s15 = int_to_ptr.vmem [resolvable:$true] %s14
      %20 = dma.hbm_to_vmem [thread:$0]  %s0, 256, %s15, [#allocation3], 128, 128, 8
    $region5: #{tpu_custom_call.1} parent=1 // pred_fallthru
      _
    // Predicated region
    $region6: #{tpu_custom_call.1} parent=1 // pred_check
      _
    $region7: #{tpu_custom_call.1} parent=1 // pred_check_branch
      %22 = sbr.rel (0) target = $region9
    $region8: #{tpu_custom_call.1} parent=1 // pred_region
      _
    $region9: #{tpu_custom_call.1} parent=1 // pred_fallthru
      _
    // Predicated region
    $region10: #{tpu_custom_call.1} parent=1 // pred_check
      _
    $region11: #{tpu_custom_call.1} parent=1 // pred_check_branch
      %24 = sbr.rel (0) target = $region13
    $region12: #{tpu_custom_call.1} parent=1 // pred_region
      %25 = dma.done [#allocation3], 256
    $region13: #{tpu_custom_call.1} parent=1 // pred_fallthru
      _
    %v26 = vld [vmem:[#allocation2] sm:$0xff]
    %v27 = vld [vmem:[#allocation2 + $0x8] sm:$0xff]
    %v28 = vld [vmem:[%s1] sm:$0x1]
    %v30 = vlaneseq
    %v31 = vshrl.u32 %v30, 7
    %v32 = vsub.s32 0, %v31
    %v33 = vrot.slane %v28, %v32
    %v35 = vmul.f32 %v26, %v33
    %v36 = vmul.f32 %v27, %v33
    %37 = vst [vmem:[#allocation5] sm:$0xff] %v35
    %38 = vst [vmem:[#allocation5 + $0x8] sm:$0xff] %v36
    // Predicated region
    $region14: #{tpu_custom_call.1} parent=1 // pred_check
      _
    $region15: #{tpu_custom_call.1} parent=1 // pred_check_branch
      %40 = sbr.rel (0) target = $region17
    $region16: #{tpu_custom_call.1} parent=1 // pred_region
      %s42 = ssub.s32 256, 256
      %43 = vsyncadd [#allocation4], %s42
      %s44 = sshll.u32 [#allocation5], 4
      %s45 = int_to_ptr.vmem [resolvable:$true] %s44
      %50 = dma.vmem_to_hbm [thread:$0]  %s45, 256, %s2, [#allocation4], 128, 128, 8
    $region17: #{tpu_custom_call.1} parent=1 // pred_fallthru
      _
    // Predicated region
    $region18: #{tpu_custom_call.1} parent=1 // pred_check
      _
    $region19: #{tpu_custom_call.1} parent=1 // pred_check_branch
      %52 = sbr.rel (0) target = $region21
    $region20: #{tpu_custom_call.1} parent=1 // pred_region
      %53 = dma.done [#allocation4], 256
    $region21: #{tpu_custom_call.1} parent=1 // pred_fallthru
      _
    %54 = vsyncpa [#allocation3], 1
    %55 = vsyncpa [#allocation4], 1

</llo_original>
